<compile_context>
chip_gen: v7x
topology: tpu7x:2x2x1
jax: 0.10.0
libtpu: 0.0.40
codegen_flags: <defaults>
</compile_context>

<pallas_src>
import jax
import jax.numpy as jnp
from jax import lax
from jax.experimental import pallas as pl
from jax.experimental.pallas import tpu as pltpu

EPS = 1e-5  # PyTorch BatchNorm1d default


def _vmem_limit_bytes():
    """Per-generation VMEM cap: half of physical, never above 96 MiB.

    v5e/v6e (128 MiB physical) -> 64 MiB, v7x (64 MiB) -> 32 MiB.  Falls back
    to a conservative 32 MiB (v7x-sized assumption) if the query fails.
    """
    try:
        cap = int(pltpu.get_tpu_info().vmem_capacity_bytes)
    except Exception:
        cap = 64 * 1024 * 1024
    return max(16 * 1024 * 1024, min(cap // 2, 96 * 1024 * 1024))


def _pick_t_tile(T, C, tile_budget_bytes):
    """Largest time tile dividing T whose double-buffered f32 x+out tiles fit."""
    for tt in (8192, 4096, 2048, 1024, 512, 256, 128):
        # 2 x-buffers + 2 out-buffers, each (C, tt) f32  ->  16 * C * tt bytes
        if T % tt == 0 and 16 * C * tt <= tile_budget_bytes:
            return tt
    return T  # small / awkward T: single full-extent time tile (valid: equals array dim)


# ----------------------------------------------------------------------------
# VMEM-resident fast path: whole activation lives in VMEM, one HBM read/write.
# ----------------------------------------------------------------------------
def _resident_forward(x, w1, w2, g1, b1, g2, b2, vmem_limit):
    N, C, T = x.shape
    inv_m = 1.0 / float(N * T)  # biased variance over the full (N*T) sample count

    def kernel(x_ref, w1_ref, w2_ref, g1_ref, b1_ref, g2_ref, b2_ref, o_ref,
               h_buf, r_buf):
        # conv1 (1x1, no bias): per batch row, h1[n] = W1 @ x[n] on the MXU.
        w1m = w1_ref[...]

        def conv1_body(i, c):
            h_buf[i] = jnp.dot(w1m, x_ref[i].astype(jnp.bfloat16),
                               preferred_element_type=jnp.float32)
            return c

        lax.fori_loop(0, N, conv1_body, 0)

        # BN1, training mode, proper two-pass stats (h1 is resident in VMEM).
        h1 = h_buf[...]                                            # (N, C, T) f32
        s1 = jnp.sum(jnp.sum(h1, axis=2, keepdims=True), axis=0, keepdims=True)
        mu1 = s1 * inv_m                                           # (1, C, 1)
        d1 = h1 - mu1
        var1 = jnp.sum(jnp.sum(d1 * d1, axis=2, keepdims=True),
                       axis=0, keepdims=True) * inv_m
        a1 = g1_ref[...].reshape(1, C, 1) * lax.rsqrt(var1 + EPS)  # BN1 scale
        sh1 = b1_ref[...].reshape(1, C, 1) - mu1 * a1              # BN1 shift
        r_buf[...] = jnp.maximum(h1 * a1 + sh1, 0.0).astype(jnp.bfloat16)

        # conv2.
        w2m = w2_ref[...]

        def conv2_body(i, c):
            h_buf[i] = jnp.dot(w2m, r_buf[i], preferred_element_type=jnp.float32)
            return c

        lax.fori_loop(0, N, conv2_body, 0)

        # BN2 + residual add, single lane-dense store of the output.
        h2 = h_buf[...]
        s2 = jnp.sum(jnp.sum(h2, axis=2, keepdims=True), axis=0, keepdims=True)
        mu2 = s2 * inv_m
        d2 = h2 - mu2
        var2 = jnp.sum(jnp.sum(d2 * d2, axis=2, keepdims=True),
                       axis=0, keepdims=True) * inv_m
        a2 = g2_ref[...].reshape(1, C, 1) * lax.rsqrt(var2 + EPS)
        sh2 = b2_ref[...].reshape(1, C, 1) - mu2 * a2
        o_ref[...] = h2 * a2 + sh2 + x_ref[...]

    cost = pl.CostEstimate(flops=4 * N * T * C * C, transcendentals=0,
                           bytes_accessed=2 * N * C * T * 4)

    return pl.pallas_call(
        kernel,
        out_shape=jax.ShapeDtypeStruct((N, C, T), jnp.float32),
        scratch_shapes=[pltpu.VMEM((N, C, T), jnp.float32),    # h1 / h2 buffer
                        pltpu.VMEM((N, C, T), jnp.bfloat16)],  # relu(BN1) buffer
        compiler_params=pltpu.CompilerParams(vmem_limit_bytes=vmem_limit),
        cost_estimate=cost,
    )(x, w1, w2, g1, b1, g2, b2)


# ----------------------------------------------------------------------------
# Streaming 3-phase path for activations that do not fit in VMEM.
# ----------------------------------------------------------------------------
def _streaming_forward(x, w1, w2, g1, b1, g2, b2, t_tile, vmem_limit):
    N, C, T = x.shape
    n_t = T // t_tile
    inv_m = 1.0 / float(N * T)

    def kernel(x_ref, w1_ref, w2_ref, g1_ref, b1_ref, g2_ref, b2_ref, o_ref,
               s1_ref, q1_ref, s2_ref, q2_ref):
        p = pl.program_id(0)
        n = pl.program_id(1)
        t = pl.program_id(2)
        is_first_tile = jnp.logical_and(n == 0, t == 0)
        is_last_tile = jnp.logical_and(n == pl.num_programs(1) - 1,
                                       t == pl.num_programs(2) - 1)

        @pl.when(jnp.logical_and(p == 0, is_first_tile))
        def _init():
            z = jnp.zeros_like(s1_ref)
            s1_ref[...] = z
            q1_ref[...] = z
            s2_ref[...] = z
            q2_ref[...] = z

        x_tile = x_ref[...]  # (C, t_tile) f32 (leading N dim squeezed by BlockSpec)

        # conv1 (1x1, no bias): h1 = W1 @ x on the MXU, bf16 operands, f32 accum.
        h1 = jnp.dot(w1_ref[...], x_tile.astype(jnp.bfloat16),
                     preferred_element_type=jnp.float32)

        @pl.when(p == 0)
        def _phase0():
            # One-pass sums (f32).  NOTE: E[h^2]-mu^2 can cancel if |mean|>>std;
            # acceptable here since conv outputs of ~zero-mean inputs are ~zero-mean.
            s1_ref[...] += jnp.sum(h1, axis=1, keepdims=True)
            q1_ref[...] += jnp.sum(h1 * h1, axis=1, keepdims=True)

            @pl.when(is_last_tile)
            def _finalize_bn1():
                mu = s1_ref[...] * inv_m
                var = q1_ref[...] * inv_m - mu * mu
                a = g1_ref[...] * lax.rsqrt(var + EPS)
                s1_ref[...] = a                      # BN1 scale
                q1_ref[...] = b1_ref[...] - mu * a   # BN1 shift

        @pl.when(p >= 1)
        def _phase12():
            # BN1 (as per-channel affine) + ReLU, then conv2.
            r = jnp.maximum(h1 * s1_ref[...] + q1_ref[...], 0.0)
            h2 = jnp.dot(w2_ref[...], r.astype(jnp.bfloat16),
                         preferred_element_type=jnp.float32)

            @pl.when(p == 1)
            def _phase1():
                s2_ref[...] += jnp.sum(h2, axis=1, keepdims=True)
                q2_ref[...] += jnp.sum(h2 * h2, axis=1, keepdims=True)

                @pl.when(is_last_tile)
                def _finalize_bn2():
                    mu = s2_ref[...] * inv_m
                    var = q2_ref[...] * inv_m - mu * mu
                    a = g2_ref[...] * lax.rsqrt(var + EPS)
                    s2_ref[...] = a                      # BN2 scale
                    q2_ref[...] = b2_ref[...] - mu * a   # BN2 shift

            @pl.when(p == 2)
            def _phase2():
                o_ref[...] = h2 * s2_ref[...] + q2_ref[...] + x_tile

    # Block specs -------------------------------------------------------------
    x_spec = pl.BlockSpec((None, C, t_tile), lambda p, n, t: (n, 0, t))
    w_spec = pl.BlockSpec((C, C), lambda p, n, t: (0, 0))
    v_spec = pl.BlockSpec((C, 1), lambda p, n, t: (0, 0))

    def out_index_map(p, n, t):
        # Pinned to block (0,0,0) during the stats phases (never written in the
        # kernel there); walks the real blocks only during phase 2 so the output
        # slab goes to HBM exactly once.
        w = p // 2
        return (n * w, 0, t * w)

    out_spec = pl.BlockSpec((None, C, t_tile), out_index_map)

    grid = (3, N, n_t)

    flops = 10 * N * T * C * C                    # two 1x1 convs, recomputed over 3 phases
    bytes_accessed = 4 * N * C * T * 4            # 3 reads of x + 1 write of out (f32)
    cost = pl.CostEstimate(flops=flops, transcendentals=0,
                           bytes_accessed=bytes_accessed)

    return pl.pallas_call(
        kernel,
        out_shape=jax.ShapeDtypeStruct((N, C, T), jnp.float32),
        grid_spec=pltpu.PrefetchScalarGridSpec(
            num_scalar_prefetch=0,
            grid=grid,
            in_specs=[x_spec, w_spec, w_spec, v_spec, v_spec, v_spec, v_spec],
            out_specs=out_spec,
            scratch_shapes=[pltpu.VMEM((C, 1), jnp.float32)] * 4,
        ),
        compiler_params=pltpu.CompilerParams(
            dimension_semantics=("arbitrary", "arbitrary", "arbitrary"),
            vmem_limit_bytes=vmem_limit,
        ),
        cost_estimate=cost,
    )(x, w1, w2, g1, b1, g2, b2)


# ----------------------------------------------------------------------------
# Dispatcher
# ----------------------------------------------------------------------------
def resblock_forward(x_nct, w1, w2, g1, b1, g2, b2, *,
                     t_tile=None, force_streaming=False):
    """x_nct: (N, C, T) float.  w1, w2: (C, C) or (C, C, 1) conv weights."""
    N, C, T = x_nct.shape
    limit = _vmem_limit_bytes()

    # Hoisted dtype / shape prep (no transposes needed: h = W @ x in (C, T) layout).
    x32 = x_nct.astype(jnp.float32)
    w1b = jnp.asarray(w1).reshape(C, C).astype(jnp.bfloat16)
    w2b = jnp.asarray(w2).reshape(C, C).astype(jnp.bfloat16)
    g1c = jnp.asarray(g1).reshape(C, 1).astype(jnp.float32)
    b1c = jnp.asarray(b1).reshape(C, 1).astype(jnp.float32)
    g2c = jnp.asarray(g2).reshape(C, 1).astype(jnp.float32)
    b2c = jnp.asarray(b2).reshape(C, 1).astype(jnp.float32)

    # Fast path: whole activation resident in VMEM (1 HBM read + 1 write of x
    # instead of 3+1).  Working set ~ x + out + f32 scratch + bf16 scratch +
    # vreg temporaries; gate with generous headroom against the per-gen limit.
    resident_bytes = N * C * T * 4
    if (not force_streaming) and t_tile is None and 8 * resident_bytes <= limit // 2:
        return _resident_forward(x32, w1b, w2b, g1c, b1c, g2c, b2c, limit)

    if t_tile is None:
        t_tile = _pick_t_tile(T, C, limit // 2)
    assert T % t_tile == 0, "T must be divisible by t_tile"
    return _streaming_forward(x32, w1b, w2b, g1c, b1c, g2c, b2c, t_tile, limit)


def resblock_reference(x, w1, w2, g1, b1, g2, b2):
    """Pure-JAX f32 reference in (N, C, T) layout, training-mode BN semantics."""
    def bn(h, g, b):
        mu = jnp.mean(h, axis=(0, 2), keepdims=True)
        var = jnp.mean((h - mu) ** 2, axis=(0, 2), keepdims=True)
        return ((h - mu) * lax.rsqrt(var + EPS) * g.reshape(1, -1, 1)
                + b.reshape(1, -1, 1))

    h = jnp.einsum('oi,nit->not', w1, x, precision=lax.Precision.HIGHEST)
    h = jnp.maximum(bn(h, g1, b1), 0.0)
    h = jnp.einsum('oi,nit->not', w2, h, precision=lax.Precision.HIGHEST)
    return bn(h, g2, b2) + x


if __name__ == "__main__":
    key = jax.random.PRNGKey(0)
    kx, kw1, kw2, kg1, kb1, kg2, kb2 = jax.random.split(key, 7)

    N, C, T = 2, 32, 256  # dims = 32 channels, seq length 256, batch 2

    x = jax.random.normal(kx, (N, C, T), dtype=jnp.float32)

    # Conv1d(dims, dims, kernel_size=1, bias=False) weights -> (C_out, C_in)
    scale = 1.0 / jnp.sqrt(jnp.float32(C))
    w1 = jax.random.normal(kw1, (C, C), dtype=jnp.float32) * scale
    w2 = jax.random.normal(kw2, (C, C), dtype=jnp.float32) * scale

    # BatchNorm1d affine params (deterministic, non-trivial)
    g1 = 1.0 + 0.1 * jax.random.normal(kg1, (C,), dtype=jnp.float32)
    b1 = 0.1 * jax.random.normal(kb1, (C,), dtype=jnp.float32)
    g2 = 1.0 + 0.1 * jax.random.normal(kg2, (C,), dtype=jnp.float32)
    b2 = 0.1 * jax.random.normal(kb2, (C,), dtype=jnp.float32)

    ref = resblock_reference(x, w1, w2, g1, b1, g2, b2)

    # 1) default dispatch: activation fits -> single-read VMEM-resident kernel
    out_res = jax.block_until_ready(resblock_forward(x, w1, w2, g1, b1, g2, b2))
    assert out_res.shape == (N, C, T)
    assert jnp.allclose(out_res, ref, atol=3e-2, rtol=3e-2), (
        "resident-path mismatch, max abs diff = "
        f"{float(jnp.max(jnp.abs(out_res - ref)))}")

    # 2) streaming 3-phase path with multiple time tiles (stats pipeline coverage)
    out_str = jax.block_until_ready(
        resblock_forward(x, w1, w2, g1, b1, g2, b2,
                         force_streaming=True, t_tile=128))
    assert jnp.allclose(out_str, ref, atol=3e-2, rtol=3e-2), (
        "streaming-path mismatch, max abs diff = "
        f"{float(jnp.max(jnp.abs(out_str - ref)))}")

    # 3) streaming path with the auto (VMEM-budget-aware) tile pick
    out_auto = jax.block_until_ready(
        resblock_forward(x, w1, w2, g1, b1, g2, b2, force_streaming=True))
    assert jnp.allclose(out_auto, ref, atol=3e-2, rtol=3e-2), "auto-tile mismatch"

    # 4) small-T fallback (T=16, resident path, full-extent blocks)
    xs = x[:, :, :16]
    refs = resblock_reference(xs, w1, w2, g1, b1, g2, b2)
    outs = jax.block_until_ready(resblock_forward(xs, w1, w2, g1, b1, g2, b2))
    assert jnp.allclose(outs, refs, atol=3e-2, rtol=3e-2), "mismatch (small-T case)"

    print("KERNEL_OK")
</pallas_src>

<mosaic_0001>
module attributes {stable_mosaic.version = 11 : i64} {
  func.func @kernel(%arg0: memref<2x32x256xf32, #tpu.memory_space<vmem>>, %arg1: memref<32x32xbf16, #tpu.memory_space<vmem>>, %arg2: memref<32x32xbf16, #tpu.memory_space<vmem>>, %arg3: memref<32x1xf32, #tpu.memory_space<vmem>>, %arg4: memref<32x1xf32, #tpu.memory_space<vmem>>, %arg5: memref<32x1xf32, #tpu.memory_space<vmem>>, %arg6: memref<32x1xf32, #tpu.memory_space<vmem>>, %arg7: memref<2x32x256xf32, #tpu.memory_space<vmem>>, %arg8: memref<2x32x256xf32, #tpu.memory_space<vmem>>, %arg9: memref<2x32x256xbf16, #tpu.memory_space<vmem>>) attributes {dimension_semantics = [], scalar_prefetch = 0 : i64, scratch_operands = 2 : i64, tpu.core_type = #tpu.core_type<tc>} {
    %c0 = arith.constant 0 : index
    %c0_0 = arith.constant 0 : index
    %0 = vector.load %arg1[%c0, %c0_0] : memref<32x32xbf16, #tpu.memory_space<vmem>>, vector<32x32xbf16>
    %c0_i32 = arith.constant 0 : i32
    %c2_i32 = arith.constant 2 : i32
    %1 = arith.addi %c0_i32, %c2_i32 : i32
    %c1_i32 = arith.constant 1 : i32
    scf.for %arg10 = %c0_i32 to %1 step %c1_i32  : i32 {
      %71 = arith.index_cast %arg10 : i32 to index
      %c0_45 = arith.constant 0 : index
      %c0_46 = arith.constant 0 : index
      %72 = vector.load %arg0[%71, %c0_45, %c0_46] : memref<2x32x256xf32, #tpu.memory_space<vmem>>, vector<1x32x256xf32>
      %73 = vector.shape_cast %72 : vector<1x32x256xf32> to vector<32x256xf32>
      %74 = arith.truncf %73 : vector<32x256xf32> to vector<32x256xbf16>
      %cst_47 = arith.constant dense<0.000000e+00> : vector<32x256xf32>
      %75 = tpu.matmul %0, %74, %cst_47 {dimension_numbers = #tpu.dot_dimension_numbers<[1], [0], [0], [1], [0, 0, 1, 1], [], []>} : vector<32x32xbf16>, vector<32x256xbf16>, vector<32x256xf32> -> vector<32x256xf32>
      %76 = arith.index_cast %arg10 : i32 to index
      %c0_48 = arith.constant 0 : index
      %c0_49 = arith.constant 0 : index
      %77 = vector.load %arg8[%76, %c0_48, %c0_49] : memref<2x32x256xf32, #tpu.memory_space<vmem>>, vector<1x32x256xf32>
      %78 = vector.shape_cast %77 : vector<1x32x256xf32> to vector<32x256xf32>
      %79 = vector.shape_cast %75 : vector<32x256xf32> to vector<1x32x256xf32>
      tpu.vector_store %arg8[%76, %c0_48, %c0_49], %79 {strides = array<i32>} : memref<2x32x256xf32, #tpu.memory_space<vmem>>, vector<1x32x256xf32>,
    }
    %c2_i32_1 = arith.constant 2 : i32
    %c0_2 = arith.constant 0 : index
    %c0_3 = arith.constant 0 : index
    %c0_4 = arith.constant 0 : index
    %2 = vector.load %arg8[%c0_2, %c0_3, %c0_4] : memref<2x32x256xf32, #tpu.memory_space<vmem>>, vector<2x32x256xf32>
    %cst = arith.constant dense<0.000000e+00> : vector<2x32xf32>
    %3 = vector.multi_reduction <add>, %2, %cst [2] : vector<2x32x256xf32> to vector<2x32xf32>
    %4 = vector.shape_cast %3 : vector<2x32xf32> to vector<2x32x1xf32>
    %cst_5 = arith.constant dense<0.000000e+00> : vector<32x1xf32>
    %5 = vector.multi_reduction <add>, %4, %cst_5 [0] : vector<2x32x1xf32> to vector<32x1xf32>
    %6 = vector.shape_cast %5 : vector<32x1xf32> to vector<1x32x1xf32>
    %cst_6 = arith.constant 0.001953125 : f32
    %7 = vector.broadcast %cst_6 : f32 to vector<1x32x1xf32>
    %8 = arith.mulf %6, %7 : vector<1x32x1xf32>
    %9 = vector.broadcast %8 : vector<1x32x1xf32> to vector<2x32x256xf32>
    %10 = arith.subf %2, %9 : vector<2x32x256xf32>
    %11 = arith.mulf %10, %10 : vector<2x32x256xf32>
    %cst_7 = arith.constant dense<0.000000e+00> : vector<2x32xf32>
    %12 = vector.multi_reduction <add>, %11, %cst_7 [2] : vector<2x32x256xf32> to vector<2x32xf32>
    %13 = vector.shape_cast %12 : vector<2x32xf32> to vector<2x32x1xf32>
    %cst_8 = arith.constant dense<0.000000e+00> : vector<32x1xf32>
    %14 = vector.multi_reduction <add>, %13, %cst_8 [0] : vector<2x32x1xf32> to vector<32x1xf32>
    %15 = vector.shape_cast %14 : vector<32x1xf32> to vector<1x32x1xf32>
    %cst_9 = arith.constant 0.001953125 : f32
    %16 = vector.broadcast %cst_9 : f32 to vector<1x32x1xf32>
    %17 = arith.mulf %15, %16 : vector<1x32x1xf32>
    %c0_10 = arith.constant 0 : index
    %c0_11 = arith.constant 0 : index
    %18 = vector.load %arg3[%c0_10, %c0_11] : memref<32x1xf32, #tpu.memory_space<vmem>>, vector<32x1xf32>
    %19 = vector.shape_cast %18 : vector<32x1xf32> to vector<1x32x1xf32>
    %cst_12 = arith.constant 9.99999974E-6 : f32
    %20 = vector.broadcast %cst_12 : f32 to vector<1x32x1xf32>
    %21 = arith.addf %17, %20 : vector<1x32x1xf32>
    %22 = math.rsqrt %21 : vector<1x32x1xf32>
    %23 = arith.mulf %19, %22 : vector<1x32x1xf32>
    %c0_13 = arith.constant 0 : index
    %c0_14 = arith.constant 0 : index
    %24 = vector.load %arg4[%c0_13, %c0_14] : memref<32x1xf32, #tpu.memory_space<vmem>>, vector<32x1xf32>
    %25 = vector.shape_cast %24 : vector<32x1xf32> to vector<1x32x1xf32>
    %26 = arith.mulf %8, %23 : vector<1x32x1xf32>
    %27 = arith.subf %25, %26 : vector<1x32x1xf32>
    %28 = vector.broadcast %23 : vector<1x32x1xf32> to vector<2x32x256xf32>
    %29 = arith.mulf %2, %28 : vector<2x32x256xf32>
    %30 = vector.broadcast %27 : vector<1x32x1xf32> to vector<2x32x256xf32>
    %31 = arith.addf %29, %30 : vector<2x32x256xf32>
    %cst_15 = arith.constant 0.000000e+00 : f32
    %32 = vector.broadcast %cst_15 : f32 to vector<2x32x256xf32>
    %33 = arith.maximumf %31, %32 : vector<2x32x256xf32>
    %34 = arith.truncf %33 : vector<2x32x256xf32> to vector<2x32x256xbf16>
    %c0_16 = arith.constant 0 : index
    %c0_17 = arith.constant 0 : index
    %c0_18 = arith.constant 0 : index
    %35 = vector.load %arg9[%c0_16, %c0_17, %c0_18] : memref<2x32x256xbf16, #tpu.memory_space<vmem>>, vector<2x32x256xbf16>
    tpu.vector_store %arg9[%c0_16, %c0_17, %c0_18], %34 {strides = array<i32>} : memref<2x32x256xbf16, #tpu.memory_space<vmem>>, vector<2x32x256xbf16>,
    %c0_19 = arith.constant 0 : index
    %c0_20 = arith.constant 0 : index
    %36 = vector.load %arg2[%c0_19, %c0_20] : memref<32x32xbf16, #tpu.memory_space<vmem>>, vector<32x32xbf16>
    %c0_i32_21 = arith.constant 0 : i32
    %c2_i32_22 = arith.constant 2 : i32
    %37 = arith.addi %c0_i32_21, %c2_i32_22 : i32
    %c1_i32_23 = arith.constant 1 : i32
    scf.for %arg10 = %c0_i32_21 to %37 step %c1_i32_23  : i32 {
      %71 = arith.index_cast %arg10 : i32 to index
      %c0_45 = arith.constant 0 : index
      %c0_46 = arith.constant 0 : index
      %72 = vector.load %arg9[%71, %c0_45, %c0_46] : memref<2x32x256xbf16, #tpu.memory_space<vmem>>, vector<1x32x256xbf16>
      %73 = vector.shape_cast %72 : vector<1x32x256xbf16> to vector<32x256xbf16>
      %cst_47 = arith.constant dense<0.000000e+00> : vector<32x256xf32>
      %74 = tpu.matmul %36, %73, %cst_47 {dimension_numbers = #tpu.dot_dimension_numbers<[1], [0], [0], [1], [0, 0, 1, 1], [], []>} : vector<32x32xbf16>, vector<32x256xbf16>, vector<32x256xf32> -> vector<32x256xf32>
      %75 = arith.index_cast %arg10 : i32 to index
      %c0_48 = arith.constant 0 : index
      %c0_49 = arith.constant 0 : index
      %76 = vector.load %arg8[%75, %c0_48, %c0_49] : memref<2x32x256xf32, #tpu.memory_space<vmem>>, vector<1x32x256xf32>
      %77 = vector.shape_cast %76 : vector<1x32x256xf32> to vector<32x256xf32>
      %78 = vector.shape_cast %74 : vector<32x256xf32> to vector<1x32x256xf32>
      tpu.vector_store %arg8[%75, %c0_48, %c0_49], %78 {strides = array<i32>} : memref<2x32x256xf32, #tpu.memory_space<vmem>>, vector<1x32x256xf32>,
    }
    %c2_i32_24 = arith.constant 2 : i32
    %c0_25 = arith.constant 0 : index
    %c0_26 = arith.constant 0 : index
    %c0_27 = arith.constant 0 : index
    %38 = vector.load %arg8[%c0_25, %c0_26, %c0_27] : memref<2x32x256xf32, #tpu.memory_space<vmem>>, vector<2x32x256xf32>
    %cst_28 = arith.constant dense<0.000000e+00> : vector<2x32xf32>
    %39 = vector.multi_reduction <add>, %38, %cst_28 [2] : vector<2x32x256xf32> to vector<2x32xf32>
    %40 = vector.shape_cast %39 : vector<2x32xf32> to vector<2x32x1xf32>
    %cst_29 = arith.constant dense<0.000000e+00> : vector<32x1xf32>
    %41 = vector.multi_reduction <add>, %40, %cst_29 [0] : vector<2x32x1xf32> to vector<32x1xf32>
    %42 = vector.shape_cast %41 : vector<32x1xf32> to vector<1x32x1xf32>
    %cst_30 = arith.constant 0.001953125 : f32
    %43 = vector.broadcast %cst_30 : f32 to vector<1x32x1xf32>
    %44 = arith.mulf %42, %43 : vector<1x32x1xf32>
    %45 = vector.broadcast %44 : vector<1x32x1xf32> to vector<2x32x256xf32>
    %46 = arith.subf %38, %45 : vector<2x32x256xf32>
    %47 = arith.mulf %46, %46 : vector<2x32x256xf32>
    %cst_31 = arith.constant dense<0.000000e+00> : vector<2x32xf32>
    %48 = vector.multi_reduction <add>, %47, %cst_31 [2] : vector<2x32x256xf32> to vector<2x32xf32>
    %49 = vector.shape_cast %48 : vector<2x32xf32> to vector<2x32x1xf32>
    %cst_32 = arith.constant dense<0.000000e+00> : vector<32x1xf32>
    %50 = vector.multi_reduction <add>, %49, %cst_32 [0] : vector<2x32x1xf32> to vector<32x1xf32>
    %51 = vector.shape_cast %50 : vector<32x1xf32> to vector<1x32x1xf32>
    %cst_33 = arith.constant 0.001953125 : f32
    %52 = vector.broadcast %cst_33 : f32 to vector<1x32x1xf32>
    %53 = arith.mulf %51, %52 : vector<1x32x1xf32>
    %c0_34 = arith.constant 0 : index
    %c0_35 = arith.constant 0 : index
    %54 = vector.load %arg5[%c0_34, %c0_35] : memref<32x1xf32, #tpu.memory_space<vmem>>, vector<32x1xf32>
    %55 = vector.shape_cast %54 : vector<32x1xf32> to vector<1x32x1xf32>
    %cst_36 = arith.constant 9.99999974E-6 : f32
    %56 = vector.broadcast %cst_36 : f32 to vector<1x32x1xf32>
    %57 = arith.addf %53, %56 : vector<1x32x1xf32>
    %58 = math.rsqrt %57 : vector<1x32x1xf32>
    %59 = arith.mulf %55, %58 : vector<1x32x1xf32>
    %c0_37 = arith.constant 0 : index
    %c0_38 = arith.constant 0 : index
    %60 = vector.load %arg6[%c0_37, %c0_38] : memref<32x1xf32, #tpu.memory_space<vmem>>, vector<32x1xf32>
    %61 = vector.shape_cast %60 : vector<32x1xf32> to vector<1x32x1xf32>
    %62 = arith.mulf %44, %59 : vector<1x32x1xf32>
    %63 = arith.subf %61, %62 : vector<1x32x1xf32>
    %64 = vector.broadcast %59 : vector<1x32x1xf32> to vector<2x32x256xf32>
    %65 = arith.mulf %38, %64 : vector<2x32x256xf32>
    %66 = vector.broadcast %63 : vector<1x32x1xf32> to vector<2x32x256xf32>
    %67 = arith.addf %65, %66 : vector<2x32x256xf32>
    %c0_39 = arith.constant 0 : index
    %c0_40 = arith.constant 0 : index
    %c0_41 = arith.constant 0 : index
    %68 = vector.load %arg0[%c0_39, %c0_40, %c0_41] : memref<2x32x256xf32, #tpu.memory_space<vmem>>, vector<2x32x256xf32>
    %69 = arith.addf %67, %68 : vector<2x32x256xf32>
    %c0_42 = arith.constant 0 : index
    %c0_43 = arith.constant 0 : index
    %c0_44 = arith.constant 0 : index
    %70 = vector.load %arg7[%c0_42, %c0_43, %c0_44] : memref<2x32x256xf32, #tpu.memory_space<vmem>>, vector<2x32x256xf32>
    tpu.vector_store %arg7[%c0_42, %c0_43, %c0_44], %69 {strides = array<i32>} : memref<2x32x256xf32, #tpu.memory_space<vmem>>, vector<2x32x256xf32>,
    return
  }
}

</mosaic_0001>

<llo_original>
// kernel: tpu_custom_call.1
$region0: #{tpu_custom_call.1}
  #allocation0 [shape = 'u32[]', space=smem, size = 0x4, offset = 0x4, fixed_abs, tag = 'smem constant byte address 0x4 - core index']
  #allocation1 [shape = 'u32[144,128]{1,0:T(1,128)}', space=vmem, size = 0x12000, scoped, tag = 'internal scratch']
  #allocation2 [shape = 'f32[2,32,256]{2,1,0:T(8,128)}', space=vmem, size = 0x10000, scoped, tag = 'scratch operand']
  #allocation3 [shape = 'bf16[2,32,256]{2,1,0:T(16,128)(2,1)}', space=vmem, size = 0x8000, scoped, tag = 'scratch operand']
  %s0 = inlined_call_operand.vmem [shape: f32[2,32,256], index: 0, kind: input, shape index: {}]
  %s1 = inlined_call_operand.hbm [shape: bf16[32,32], index: 1, kind: input, shape index: {}]
  %s2 = inlined_call_operand.hbm [shape: bf16[32,32], index: 2, kind: input, shape index: {}]
  %s3 = inlined_call_operand.vmem [shape: f32[32,1], index: 3, kind: input, shape index: {}]
  %s4 = inlined_call_operand.vmem [shape: f32[32,1], index: 4, kind: input, shape index: {}]
  %s5 = inlined_call_operand.vmem [shape: f32[32,1], index: 5, kind: input, shape index: {}]
  %s6 = inlined_call_operand.vmem [shape: f32[32,1], index: 6, kind: input, shape index: {}]
  %s7 = inlined_call_operand.hbm [shape: f32[2,32,256], index: 7, kind: output, shape index: {}]
  %s8 = sld [smem:[#allocation0]]
  $region60: #{tpu_custom_call.1} parent=0
    _
  %s10 = ssub.s32 1, %s8
  %s11 = scalar_select 0, %s10, %s8
  $region1: #{tpu_custom_call.1} parent=0
    #allocation4 [shape = 'u8[8192]{0}', space=vmem, size = 0x2000, scoped, tag = 'input window, operand 1, single buffered']
    #allocation5 [shape = 's32[1]{0}', space=sflag, size = 0x4, scoped, tag = 'scoped memory for tpu_custom_call.1']
    #allocation6 [shape = 's32[1]{0}', space=sflag, size = 0x4, scoped, tag = 'scoped memory for tpu_custom_call.1']
    #allocation7 [shape = 'u8[8192]{0}', space=vmem, size = 0x2000, scoped, tag = 'input window, operand 2, single buffered']
    #allocation8 [shape = 's32[1]{0}', space=sflag, size = 0x4, scoped, tag = 'scoped memory for tpu_custom_call.1']
    #allocation9 [shape = 'u8[65536]{0}', space=vmem, size = 0x10000, scoped, tag = 'output window, operand 0, single buffered']
    %12 = vsyncpa [#allocation5], 0
    %13 = vsyncpa [#allocation8], 0
    %14 = vsyncpa [#allocation6], 0
    // Predicated region
    $region2: #{tpu_custom_call.1} parent=1 // pred_check
      _
    $region3: #{tpu_custom_call.1} parent=1 // pred_check_branch
      %16 = sbr.rel (0) target = $region5
    $region4: #{tpu_custom_call.1} parent=1 // pred_region
      _
    $region5: #{tpu_custom_call.1} parent=1 // pred_fallthru
      _
    // Predicated region
    $region6: #{tpu_custom_call.1} parent=1 // pred_check
      _
    $region7: #{tpu_custom_call.1} parent=1 // pred_check_branch
      %18 = sbr.rel (0) target = $region9
    $region8: #{tpu_custom_call.1} parent=1 // pred_region
      %s20 = ssub.s32 256, 256
      %21 = vsyncadd [#allocation5], %s20
      %s22 = sshll.u32 [#allocation4], 4
      %s23 = int_to_ptr.vmem [resolvable:$true] %s22
      %28 = dma.hbm_to_vmem [thread:$0]  %s1, 256, %s23, [#allocation5], 64, 64, 4
    $region9: #{tpu_custom_call.1} parent=1 // pred_fallthru
      _
    // Predicated region
    $region10: #{tpu_custom_call.1} parent=1 // pred_check
      _
    $region11: #{tpu_custom_call.1} parent=1 // pred_check_branch
      %30 = sbr.rel (0) target = $region13
    $region12: #{tpu_custom_call.1} parent=1 // pred_region
      %s32 = ssub.s32 256, 256
      %33 = vsyncadd [#allocation8], %s32
      %s34 = sshll.u32 [#allocation7], 4
      %s35 = int_to_ptr.vmem [resolvable:$true] %s34
      %40 = dma.hbm_to_vmem [thread:$0]  %s2, 256, %s35, [#allocation8], 64, 64, 4
    $region13: #{tpu_custom_call.1} parent=1 // pred_fallthru
      _
    // Predicated region
    $region14: #{tpu_custom_call.1} parent=1 // pred_check
      _
    $region15: #{tpu_custom_call.1} parent=1 // pred_check_branch
      %42 = sbr.rel (0) target = $region17
    $region16: #{tpu_custom_call.1} parent=1 // pred_region
      _
    $region17: #{tpu_custom_call.1} parent=1 // pred_fallthru
      _
    // Predicated region
    $region18: #{tpu_custom_call.1} parent=1 // pred_check
      _
    $region19: #{tpu_custom_call.1} parent=1 // pred_check_branch
      %44 = sbr.rel (0) target = $region21
    $region20: #{tpu_custom_call.1} parent=1 // pred_region
      _
    $region21: #{tpu_custom_call.1} parent=1 // pred_fallthru
      _
    // Predicated region
    $region22: #{tpu_custom_call.1} parent=1 // pred_check
      _
    $region23: #{tpu_custom_call.1} parent=1 // pred_check_branch
      %46 = sbr.rel (0) target = $region25
    $region24: #{tpu_custom_call.1} parent=1 // pred_region
      _
    $region25: #{tpu_custom_call.1} parent=1 // pred_fallthru
      _
    // Predicated region
    $region26: #{tpu_custom_call.1} parent=1 // pred_check
      _
    $region27: #{tpu_custom_call.1} parent=1 // pred_check_branch
      %48 = sbr.rel (0) target = $region29
    $region28: #{tpu_custom_call.1} parent=1 // pred_region
      _
    $region29: #{tpu_custom_call.1} parent=1 // pred_fallthru
      _
    // Predicated region
    $region30: #{tpu_custom_call.1} parent=1 // pred_check
      _
    $region31: #{tpu_custom_call.1} parent=1 // pred_check_branch
      %50 = sbr.rel (0) target = $region33
    $region32: #{tpu_custom_call.1} parent=1 // pred_region
      %51 = dma.done [#allocation5], 256
    $region33: #{tpu_custom_call.1} parent=1 // pred_fallthru
      _
    // Predicated region
    $region34: #{tpu_custom_call.1} parent=1 // pred_check
      _
    $region35: #{tpu_custom_call.1} parent=1 // pred_check_branch
      %53 = sbr.rel (0) target = $region37
    $region36: #{tpu_custom_call.1} parent=1 // pred_region
      %54 = dma.done [#allocation8], 256
    $region37: #{tpu_custom_call.1} parent=1 // pred_fallthru
      _
    %v56 = vld [vmem:[#allocation4] sm:$0xf]
    %v57 = vld [vmem:[#allocation4 + $0x4] sm:$0xf]
    %v58 = vld [vmem:[#allocation4 + $0x8] sm:$0xf]
    %v59 = vld [vmem:[#allocation4 + $0xc] sm:$0xf]
    loop: start=0, step=1, limit=2
    $region38: #{tpu_custom_call.1} parent=1 // loop_pre_header
      _
    $region39: #{tpu_custom_call.1} parent=1 // loop_header
      %s61 = sphi 0, %s65
      %p62 = scmp.ge.s32.totalorder %s61, 2
    $region40: #{tpu_custom_call.1} parent=1 // loop_header_branch
      %64 = sbr.rel (%p62) target = $region44
    $region41: #{tpu_custom_call.1} parent=1 // loop_body
      %s66 = smul.u32 %s61, 8
      %s67 = smul.addr %s66, 8
      %s68 = scalar_lea.vmem %s0, %s67
      %v69 = vld [vmem:[%s68] sm:$0xff]
      %v70 = vld [vmem:[%s68 + $0x8] sm:$0xff]
      %v71 = vld [vmem:[%s68 + $0x10] sm:$0xff]
      %v72 = vld [vmem:[%s68 + $0x18] sm:$0xff]
      %v73 = vld [vmem:[%s68 + $0x20] sm:$0xff]
      %v74 = vld [vmem:[%s68 + $0x28] sm:$0xff]
      %v75 = vld [vmem:[%s68 + $0x30] sm:$0xff]
      %v76 = vld [vmem:[%s68 + $0x38] sm:$0xff]
      %v77 = vpack.c.bf16 %v71, %v69
      %v78 = vpack.c.bf16 %v72, %v70
      %v79 = vpack.c.bf16 %v75, %v73
      %v80 = vpack.c.bf16 %v76, %v74
      %v85 = vunpack.c.l.b16 %v56
      %v86 = vunpack.c.l.b16 %v57
      %v87 = vunpack.c.l.b16 %v58
      %v88 = vunpack.c.l.b16 %v59
      %v89 = vpack.c.b16 %v86, %v85
      %v90 = vpack.c.b16 %v88, %v87
      %vm91 = vcmask 261120
      %v93 = vsel %vm91, %v89, 0
      %v96 = vsel %vm91, %v90, 0
      %98 = vmatprep.subr.bf16.mxu0 %v78
      %99 = vmatpush1.bf16.msra.mxu0 %v77
      %100 = vmatprep.subr.bf16.mxu0 %v80
      %101 = vmatpush1.bf16.msra.mxu0 %v79
      %102 = vmatprep.subr.bf16.mxu0 0
      %103 = vmatpush1.bf16.msra.mxu0 0
      %104 = vmatprep.subr.bf16.mxu0 0
      %105 = vmatpush1.bf16.msra.mxu0 0
      %106 = vmatprep.subr.bf16.mxu0 0
      %107 = vmatpush1.bf16.msra.mxu0 0
      %108 = vmatprep.subr.bf16.mxu0 0
      %109 = vmatpush1.bf16.msra.mxu0 0
      %110 = vmatprep.subr.bf16.mxu0 0
      %111 = vmatpush1.bf16.msra.mxu0 0
      %112 = vmatprep.subr.bf16.mxu0 0
      %113 = vmatpush1.bf16.msra.mxu0 0
      %114 = vmatprep.subr.bf16.mxu0 0
      %115 = vmatpush1.bf16.msra.mxu0 0
      %116 = vmatprep.subr.bf16.mxu0 0
      %117 = vmatpush1.bf16.msra.mxu0 0
      %118 = vmatprep.subr.bf16.mxu0 0
      %119 = vmatpush1.bf16.msra.mxu0 0
      %120 = vmatprep.subr.bf16.mxu0 0
      %121 = vmatpush1.bf16.msra.mxu0 0
      %122 = vmatprep.subr.bf16.mxu0 0
      %123 = vmatpush1.bf16.msra.mxu0 0
      %124 = vmatprep.subr.bf16.mxu0 0
      %125 = vmatpush1.bf16.msra.mxu0 0
      %126 = vmatprep.subr.bf16.mxu0 0
      %127 = vmatpush1.bf16.msra.mxu0 0
      %128 = vmatprep.subr.bf16.mxu0 0
      %129 = vmatpush1.bf16.msra.mxu0 0
      %130 = vmatprep.mubr.bf16.mxu0 0
      %131 = vmatmul.mubr.bf16.gmra.mrb[0].mxu0 %v93
      %v132 = vpop.f32.mrb[0].mxu0
      %v133 = vadd.f32 0.0, %v132
      %v134 = vpop.f32.mrb[0].mxu0
      %v135 = vadd.f32 0.0, %v134
      %v136 = vpop.f32.mrb[0].mxu0
      %v137 = vadd.f32 0.0, %v136
      %v138 = vpop.f32.mrb[0].mxu0
      %v139 = vadd.f32 0.0, %v138
      %140 = vmatprep.mubr.bf16.mxu0 0
      %141 = vmatmul.mubr.bf16.gmra.mrb[0].mxu0 %v96
      %v142 = vpop.f32.mrb[0].mxu0
      %v143 = vadd.f32 0.0, %v142
      %v144 = vpop.f32.mrb[0].mxu0
      %v145 = vadd.f32 0.0, %v144
      %v146 = vpop.f32.mrb[0].mxu0
      %v147 = vadd.f32 0.0, %v146
      %v148 = vpop.f32.mrb[0].mxu0
      %v149 = vadd.f32 0.0, %v148
      %150 = vdwg.mxu0
      %s151 = smul.addr %s66, 8
      %s152 = scalar_lea.vmem [#allocation2], %s151
      %153 = vst [vmem:[%s152] sm:$0xff] %v133
      %154 = vst [vmem:[%s152 + $0x8] sm:$0xff] %v135
      %155 = vst [vmem:[%s152 + $0x10] sm:$0xff] %v137
      %156 = vst [vmem:[%s152 + $0x18] sm:$0xff] %v139
      %157 = vst [vmem:[%s152 + $0x20] sm:$0xff] %v143
      %158 = vst [vmem:[%s152 + $0x28] sm:$0xff] %v145
      %159 = vst [vmem:[%s152 + $0x30] sm:$0xff] %v147
      %160 = vst [vmem:[%s152 + $0x38] sm:$0xff] %v149
    $region42: #{tpu_custom_call.1} parent=1 // loop_footer
      %s65 = sadd.s32 1, %s61
    $region43: #{tpu_custom_call.1} parent=1 // loop_footer_branch
      %60 = sbr.rel target = $region39
    $region44: #{tpu_custom_call.1} parent=1 // loop_exit
      _
    %v161 = vld [vmem:[#allocation2] sm:$0xff]
    %v162 = vld [vmem:[#allocation2 + $0x8] sm:$0xff]
    %v163 = vld [vmem:[#allocation2 + $0x10] sm:$0xff]
    %v164 = vld [vmem:[#allocation2 + $0x18] sm:$0xff]
    %v165 = vld [vmem:[#allocation2 + $0x20] sm:$0xff]
    %v166 = vld [vmem:[#allocation2 + $0x28] sm:$0xff]
    %v167 = vld [vmem:[#allocation2 + $0x30] sm:$0xff]
    %v168 = vld [vmem:[#allocation2 + $0x38] sm:$0xff]
    %v169 = vld [vmem:[#allocation2 + $0x40] sm:$0xff]
    %v170 = vld [vmem:[#allocation2 + $0x48] sm:$0xff]
    %v171 = vld [vmem:[#allocation2 + $0x50] sm:$0xff]
    %v172 = vld [vmem:[#allocation2 + $0x58] sm:$0xff]
    %v173 = vld [vmem:[#allocation2 + $0x60] sm:$0xff]
    %v174 = vld [vmem:[#allocation2 + $0x68] sm:$0xff]
    %v175 = vld [vmem:[#allocation2 + $0x70] sm:$0xff]
    %v176 = vld [vmem:[#allocation2 + $0x78] sm:$0xff]
    %v177 = vadd.f32 %v161, %v162
    %178 = vadd.xlane.f32.xlu0 %v177
    %v179 = vpop.xlane.xlu0 %178
    %v180 = vadd.f32 %v163, %v164
    %181 = vadd.xlane.f32.xlu0 %v180
    %v182 = vpop.xlane.xlu0 %181
    %v183 = vadd.f32 %v165, %v166
    %184 = vadd.xlane.f32.xlu0 %v183
    %v185 = vpop.xlane.xlu0 %184
    %v186 = vadd.f32 %v167, %v168
    %187 = vadd.xlane.f32.xlu0 %v186
    %v188 = vpop.xlane.xlu0 %187
    %v189 = vadd.f32 %v169, %v170
    %190 = vadd.xlane.f32.xlu0 %v189
    %v191 = vpop.xlane.xlu0 %190
    %v192 = vadd.f32 %v171, %v172
    %193 = vadd.xlane.f32.xlu0 %v192
    %v194 = vpop.xlane.xlu0 %193
    %v195 = vadd.f32 %v173, %v174
    %196 = vadd.xlane.f32.xlu0 %v195
    %v197 = vpop.xlane.xlu0 %196
    %v198 = vadd.f32 %v175, %v176
    %199 = vadd.xlane.f32.xlu0 %v198
    %v200 = vpop.xlane.xlu0 %199
    %v201 = vadd.f32 %v179, %v191
    %v202 = vadd.f32 %v182, %v194
    %v203 = vadd.f32 %v185, %v197
    %v204 = vadd.f32 %v188, %v200
    %v205 = vmul.f32 %v201, 0.001953125
    %v206 = vmul.f32 %v202, 0.001953125
    %v207 = vmul.f32 %v203, 0.001953125
    %v208 = vmul.f32 %v204, 0.001953125
    %v209 = vsub.f32 %v161, %v205
    %v210 = vsub.f32 %v162, %v205
    %v211 = vsub.f32 %v163, %v206
    %v212 = vsub.f32 %v164, %v206
    %v213 = vsub.f32 %v165, %v207
    %v214 = vsub.f32 %v166, %v207
    %v215 = vsub.f32 %v167, %v208
    %v216 = vsub.f32 %v168, %v208
    %v217 = vsub.f32 %v169, %v205
    %v218 = vsub.f32 %v170, %v205
    %v219 = vsub.f32 %v171, %v206
    %v220 = vsub.f32 %v172, %v206
    %v221 = vsub.f32 %v173, %v207
    %v222 = vsub.f32 %v174, %v207
    %v223 = vsub.f32 %v175, %v208
    %v224 = vsub.f32 %v176, %v208
    %v225 = vmul.f32 %v209, %v209
    %v226 = vmul.f32 %v210, %v210
    %v227 = vmul.f32 %v211, %v211
    %v228 = vmul.f32 %v212, %v212
    %v229 = vmul.f32 %v213, %v213
    %v230 = vmul.f32 %v214, %v214
    %v231 = vmul.f32 %v215, %v215
    %v232 = vmul.f32 %v216, %v216
    %v233 = vmul.f32 %v217, %v217
    %v234 = vmul.f32 %v218, %v218
    %v235 = vmul.f32 %v219, %v219
    %v236 = vmul.f32 %v220, %v220
    %v237 = vmul.f32 %v221, %v221
    %v238 = vmul.f32 %v222, %v222
    %v239 = vmul.f32 %v223, %v223
    %v240 = vmul.f32 %v224, %v224
    %v241 = vadd.f32 %v225, %v226
    %242 = vadd.xlane.f32.xlu0 %v241
    %v243 = vpop.xlane.xlu0 %242
    %v244 = vadd.f32 %v227, %v228
    %245 = vadd.xlane.f32.xlu0 %v244
    %v246 = vpop.xlane.xlu0 %245
    %v247 = vadd.f32 %v229, %v230
    %248 = vadd.xlane.f32.xlu0 %v247
    %v249 = vpop.xlane.xlu0 %248
    %v250 = vadd.f32 %v231, %v232
    %251 = vadd.xlane.f32.xlu0 %v250
    %v252 = vpop.xlane.xlu0 %251
    %v253 = vadd.f32 %v233, %v234
    %254 = vadd.xlane.f32.xlu0 %v253
    %v255 = vpop.xlane.xlu0 %254
    %v256 = vadd.f32 %v235, %v236
    %257 = vadd.xlane.f32.xlu0 %v256
    %v258 = vpop.xlane.xlu0 %257
    %v259 = vadd.f32 %v237, %v238
    %260 = vadd.xlane.f32.xlu0 %v259
    %v261 = vpop.xlane.xlu0 %260
    %v262 = vadd.f32 %v239, %v240
    %263 = vadd.xlane.f32.xlu0 %v262
    %v264 = vpop.xlane.xlu0 %263
    %v265 = vadd.f32 %v243, %v255
    %v266 = vadd.f32 %v246, %v258
    %v267 = vadd.f32 %v249, %v261
    %v268 = vadd.f32 %v252, %v264
    %v269 = vmul.f32 %v265, 0.001953125
    %v270 = vmul.f32 %v266, 0.001953125
    %v271 = vmul.f32 %v267, 0.001953125
    %v272 = vmul.f32 %v268, 0.001953125
    %v273 = vld [vmem:[%s3] sm:$0xff]
    %v274 = vld [vmem:[%s3 + $0x8] sm:$0xff]
    %v275 = vld [vmem:[%s3 + $0x10] sm:$0xff]
    %v276 = vld [vmem:[%s3 + $0x18] sm:$0xff]
    %v277 = vadd.f32 %v269, 1e-05
    %v278 = vadd.f32 %v270, 1e-05
    %v279 = vadd.f32 %v271, 1e-05
    %v280 = vadd.f32 %v272, 1e-05
    %v281 = vrsqrt.pop %v277
    %v282 = vrsqrt.pop %v278
    %v283 = vrsqrt.pop %v279
    %v284 = vrsqrt.pop %v280
    %v285 = vmul.f32 %v273, %v281
    %v286 = vmul.f32 %v274, %v282
    %v287 = vmul.f32 %v275, %v283
    %v288 = vmul.f32 %v276, %v284
    %v289 = vld [vmem:[%s4] sm:$0xff]
    %v290 = vld [vmem:[%s4 + $0x8] sm:$0xff]
    %v291 = vld [vmem:[%s4 + $0x10] sm:$0xff]
    %v292 = vld [vmem:[%s4 + $0x18] sm:$0xff]
    %v293 = vmul.f32 %v205, %v285
    %v294 = vmul.f32 %v206, %v286
    %v295 = vmul.f32 %v207, %v287
    %v296 = vmul.f32 %v208, %v288
    %v297 = vsub.f32 %v289, %v293
    %v298 = vsub.f32 %v290, %v294
    %v299 = vsub.f32 %v291, %v295
    %v300 = vsub.f32 %v292, %v296
    %302 = vset.pattern.permute.xlu0 0
    %303 = vperm.xlu0 %302, %v285
    %v304 = vpop.permute.xlu0 %303
    %307 = vset.pattern.permute.xlu0 0
    %308 = vperm.xlu0 %307, %v286
    %v309 = vpop.permute.xlu0 %308
    %312 = vset.pattern.permute.xlu0 0
    %313 = vperm.xlu0 %312, %v287
    %v314 = vpop.permute.xlu0 %313
    %317 = vset.pattern.permute.xlu0 0
    %318 = vperm.xlu0 %317, %v288
    %v319 = vpop.permute.xlu0 %318
    %v321 = vmul.f32 %v161, %v304
    %v322 = vmul.f32 %v162, %v304
    %v323 = vmul.f32 %v163, %v309
    %v324 = vmul.f32 %v164, %v309
    %v325 = vmul.f32 %v165, %v314
    %v326 = vmul.f32 %v166, %v314
    %v327 = vmul.f32 %v167, %v319
    %v328 = vmul.f32 %v168, %v319
    %v329 = vmul.f32 %v169, %v304
    %v330 = vmul.f32 %v170, %v304
    %v331 = vmul.f32 %v171, %v309
    %v332 = vmul.f32 %v172, %v309
    %v333 = vmul.f32 %v173, %v314
    %v334 = vmul.f32 %v174, %v314
    %v335 = vmul.f32 %v175, %v319
    %v336 = vmul.f32 %v176, %v319
    %338 = vset.pattern.permute.xlu0 0
    %339 = vperm.xlu0 %338, %v297
    %v340 = vpop.permute.xlu0 %339
    %343 = vset.pattern.permute.xlu0 0
    %344 = vperm.xlu0 %343, %v298
    %v345 = vpop.permute.xlu0 %344
    %348 = vset.pattern.permute.xlu0 0
    %349 = vperm.xlu0 %348, %v299
    %v350 = vpop.permute.xlu0 %349
    %353 = vset.pattern.permute.xlu0 0
    %354 = vperm.xlu0 %353, %v300
    %v355 = vpop.permute.xlu0 %354
    %v357 = vadd.f32 %v321, %v340
    %v358 = vadd.f32 %v322, %v340
    %v359 = vadd.f32 %v323, %v345
    %v360 = vadd.f32 %v324, %v345
    %v361 = vadd.f32 %v325, %v350
    %v362 = vadd.f32 %v326, %v350
    %v363 = vadd.f32 %v327, %v355
    %v364 = vadd.f32 %v328, %v355
    %v365 = vadd.f32 %v329, %v340
    %v366 = vadd.f32 %v330, %v340
    %v367 = vadd.f32 %v331, %v345
    %v368 = vadd.f32 %v332, %v345
    %v369 = vadd.f32 %v333, %v350
    %v370 = vadd.f32 %v334, %v350
    %v371 = vadd.f32 %v335, %v355
    %v372 = vadd.f32 %v336, %v355
    %v373 = vmax.f32 %v357, 0.0
    %v374 = vmax.f32 %v358, 0.0
    %v375 = vmax.f32 %v359, 0.0
    %v376 = vmax.f32 %v360, 0.0
    %v377 = vmax.f32 %v361, 0.0
    %v378 = vmax.f32 %v362, 0.0
    %v379 = vmax.f32 %v363, 0.0
    %v380 = vmax.f32 %v364, 0.0
    %v381 = vmax.f32 %v365, 0.0
    %v382 = vmax.f32 %v366, 0.0
    %v383 = vmax.f32 %v367, 0.0
    %v384 = vmax.f32 %v368, 0.0
    %v385 = vmax.f32 %v369, 0.0
    %v386 = vmax.f32 %v370, 0.0
    %v387 = vmax.f32 %v371, 0.0
    %v388 = vmax.f32 %v372, 0.0
    %v389 = vpack.c.bf16 %v375, %v373
    %v390 = vpack.c.bf16 %v376, %v374
    %v391 = vpack.c.bf16 %v379, %v377
    %v392 = vpack.c.bf16 %v380, %v378
    %v393 = vpack.c.bf16 %v383, %v381
    %v394 = vpack.c.bf16 %v384, %v382
    %v395 = vpack.c.bf16 %v387, %v385
    %v396 = vpack.c.bf16 %v388, %v386
    %397 = vst [vmem:[#allocation3] sm:$0xff] %v389
    %398 = vst [vmem:[#allocation3 + $0x8] sm:$0xff] %v390
    %399 = vst [vmem:[#allocation3 + $0x10] sm:$0xff] %v391
    %400 = vst [vmem:[#allocation3 + $0x18] sm:$0xff] %v392
    %401 = vst [vmem:[#allocation3 + $0x20] sm:$0xff] %v393
    %402 = vst [vmem:[#allocation3 + $0x28] sm:$0xff] %v394
    %403 = vst [vmem:[#allocation3 + $0x30] sm:$0xff] %v395
    %404 = vst [vmem:[#allocation3 + $0x38] sm:$0xff] %v396
    %v405 = vld [vmem:[#allocation7] sm:$0xf]
    %v406 = vld [vmem:[#allocation7 + $0x4] sm:$0xf]
    %v407 = vld [vmem:[#allocation7 + $0x8] sm:$0xf]
    %v408 = vld [vmem:[#allocation7 + $0xc] sm:$0xf]
    loop: start=0, step=1, limit=2
    $region45: #{tpu_custom_call.1} parent=1 // loop_pre_header
      _
    $region46: #{tpu_custom_call.1} parent=1 // loop_header
      %s410 = sphi 0, %s414
      %p411 = scmp.ge.s32.totalorder %s410, 2
    $region47: #{tpu_custom_call.1} parent=1 // loop_header_branch
      %413 = sbr.rel (%p411) target = $region51
    $region48: #{tpu_custom_call.1} parent=1 // loop_body
      %s415 = smul.u32 %s410, 4
      %s416 = smul.addr %s415, 8
      %s417 = scalar_lea.vmem [#allocation3], %s416
      %v418 = vld [vmem:[%s417] sm:$0xff]
      %v419 = vld [vmem:[%s417 + $0x8] sm:$0xff]
      %v420 = vld [vmem:[%s417 + $0x10] sm:$0xff]
      %v421 = vld [vmem:[%s417 + $0x18] sm:$0xff]
      %v426 = vunpack.c.l.b16 %v405
      %v427 = vunpack.c.l.b16 %v406
      %v428 = vunpack.c.l.b16 %v407
      %v429 = vunpack.c.l.b16 %v408
      %v430 = vpack.c.b16 %v427, %v426
      %v431 = vpack.c.b16 %v429, %v428
      %vm432 = vcmask 261120
      %v434 = vsel %vm432, %v430, 0
      %v437 = vsel %vm432, %v431, 0
      %439 = vmatprep.subr.bf16.mxu0 %v419
      %440 = vmatpush1.bf16.msra.mxu0 %v418
      %441 = vmatprep.subr.bf16.mxu0 %v421
      %442 = vmatpush1.bf16.msra.mxu0 %v420
      %443 = vmatprep.subr.bf16.mxu0 0
      %444 = vmatpush1.bf16.msra.mxu0 0
      %445 = vmatprep.subr.bf16.mxu0 0
      %446 = vmatpush1.bf16.msra.mxu0 0
      %447 = vmatprep.subr.bf16.mxu0 0
      %448 = vmatpush1.bf16.msra.mxu0 0
      %449 = vmatprep.subr.bf16.mxu0 0
      %450 = vmatpush1.bf16.msra.mxu0 0
      %451 = vmatprep.subr.bf16.mxu0 0
      %452 = vmatpush1.bf16.msra.mxu0 0
      %453 = vmatprep.subr.bf16.mxu0 0
      %454 = vmatpush1.bf16.msra.mxu0 0
      %455 = vmatprep.subr.bf16.mxu0 0
      %456 = vmatpush1.bf16.msra.mxu0 0
      %457 = vmatprep.subr.bf16.mxu0 0
      %458 = vmatpush1.bf16.msra.mxu0 0
      %459 = vmatprep.subr.bf16.mxu0 0
      %460 = vmatpush1.bf16.msra.mxu0 0
      %461 = vmatprep.subr.bf16.mxu0 0
      %462 = vmatpush1.bf16.msra.mxu0 0
      %463 = vmatprep.subr.bf16.mxu0 0
      %464 = vmatpush1.bf16.msra.mxu0 0
      %465 = vmatprep.subr.bf16.mxu0 0
      %466 = vmatpush1.bf16.msra.mxu0 0
      %467 = vmatprep.subr.bf16.mxu0 0
      %468 = vmatpush1.bf16.msra.mxu0 0
      %469 = vmatprep.subr.bf16.mxu0 0
      %470 = vmatpush1.bf16.msra.mxu0 0
      %471 = vmatprep.mubr.bf16.mxu0 0
      %472 = vmatmul.mubr.bf16.gmra.mrb[0].mxu0 %v434
      %v473 = vpop.f32.mrb[0].mxu0
      %v474 = vadd.f32 0.0, %v473
      %v475 = vpop.f32.mrb[0].mxu0
      %v476 = vadd.f32 0.0, %v475
      %v477 = vpop.f32.mrb[0].mxu0
      %v478 = vadd.f32 0.0, %v477
      %v479 = vpop.f32.mrb[0].mxu0
      %v480 = vadd.f32 0.0, %v479
      %481 = vmatprep.mubr.bf16.mxu0 0
      %482 = vmatmul.mubr.bf16.gmra.mrb[0].mxu0 %v437
      %v483 = vpop.f32.mrb[0].mxu0
      %v484 = vadd.f32 0.0, %v483
      %v485 = vpop.f32.mrb[0].mxu0
      %v486 = vadd.f32 0.0, %v485
      %v487 = vpop.f32.mrb[0].mxu0
      %v488 = vadd.f32 0.0, %v487
      %v489 = vpop.f32.mrb[0].mxu0
      %v490 = vadd.f32 0.0, %v489
      %491 = vdwg.mxu0
      %s492 = smul.u32 %s410, 8
      %s493 = smul.addr %s492, 8
      %s494 = scalar_lea.vmem [#allocation2], %s493
      %495 = vst [vmem:[%s494] sm:$0xff] %v474
      %496 = vst [vmem:[%s494 + $0x8] sm:$0xff] %v476
      %497 = vst [vmem:[%s494 + $0x10] sm:$0xff] %v478
      %498 = vst [vmem:[%s494 + $0x18] sm:$0xff] %v480
      %499 = vst [vmem:[%s494 + $0x20] sm:$0xff] %v484
      %500 = vst [vmem:[%s494 + $0x28] sm:$0xff] %v486
      %501 = vst [vmem:[%s494 + $0x30] sm:$0xff] %v488
      %502 = vst [vmem:[%s494 + $0x38] sm:$0xff] %v490
    $region49: #{tpu_custom_call.1} parent=1 // loop_footer
      %s414 = sadd.s32 1, %s410
    $region50: #{tpu_custom_call.1} parent=1 // loop_footer_branch
      %409 = sbr.rel target = $region46
    $region51: #{tpu_custom_call.1} parent=1 // loop_exit
      _
    %v503 = vld [vmem:[#allocation2] sm:$0xff]
    %v504 = vld [vmem:[#allocation2 + $0x8] sm:$0xff]
    %v505 = vld [vmem:[#allocation2 + $0x10] sm:$0xff]
    %v506 = vld [vmem:[#allocation2 + $0x18] sm:$0xff]
    %v507 = vld [vmem:[#allocation2 + $0x20] sm:$0xff]
    %v508 = vld [vmem:[#allocation2 + $0x28] sm:$0xff]
    %v509 = vld [vmem:[#allocation2 + $0x30] sm:$0xff]
    %v510 = vld [vmem:[#allocation2 + $0x38] sm:$0xff]
    %v511 = vld [vmem:[#allocation2 + $0x40] sm:$0xff]
    %v512 = vld [vmem:[#allocation2 + $0x48] sm:$0xff]
    %v513 = vld [vmem:[#allocation2 + $0x50] sm:$0xff]
    %v514 = vld [vmem:[#allocation2 + $0x58] sm:$0xff]
    %v515 = vld [vmem:[#allocation2 + $0x60] sm:$0xff]
    %v516 = vld [vmem:[#allocation2 + $0x68] sm:$0xff]
    %v517 = vld [vmem:[#allocation2 + $0x70] sm:$0xff]
    %v518 = vld [vmem:[#allocation2 + $0x78] sm:$0xff]
    %v519 = vadd.f32 %v503, %v504
    %520 = vadd.xlane.f32.xlu0 %v519
    %v521 = vpop.xlane.xlu0 %520
    %v522 = vadd.f32 %v505, %v506
    %523 = vadd.xlane.f32.xlu0 %v522
    %v524 = vpop.xlane.xlu0 %523
    %v525 = vadd.f32 %v507, %v508
    %526 = vadd.xlane.f32.xlu0 %v525
    %v527 = vpop.xlane.xlu0 %526
    %v528 = vadd.f32 %v509, %v510
    %529 = vadd.xlane.f32.xlu0 %v528
    %v530 = vpop.xlane.xlu0 %529
    %v531 = vadd.f32 %v511, %v512
    %532 = vadd.xlane.f32.xlu0 %v531
    %v533 = vpop.xlane.xlu0 %532
    %v534 = vadd.f32 %v513, %v514
    %535 = vadd.xlane.f32.xlu0 %v534
    %v536 = vpop.xlane.xlu0 %535
    %v537 = vadd.f32 %v515, %v516
    %538 = vadd.xlane.f32.xlu0 %v537
    %v539 = vpop.xlane.xlu0 %538
    %v540 = vadd.f32 %v517, %v518
    %541 = vadd.xlane.f32.xlu0 %v540
    %v542 = vpop.xlane.xlu0 %541
    %v543 = vadd.f32 %v521, %v533
    %v544 = vadd.f32 %v524, %v536
    %v545 = vadd.f32 %v527, %v539
    %v546 = vadd.f32 %v530, %v542
    %v547 = vmul.f32 %v543, 0.001953125
    %v548 = vmul.f32 %v544, 0.001953125
    %v549 = vmul.f32 %v545, 0.001953125
    %v550 = vmul.f32 %v546, 0.001953125
    %v551 = vsub.f32 %v503, %v547
    %v552 = vsub.f32 %v504, %v547
    %v553 = vsub.f32 %v505, %v548
    %v554 = vsub.f32 %v506, %v548
    %v555 = vsub.f32 %v507, %v549
    %v556 = vsub.f32 %v508, %v549
    %v557 = vsub.f32 %v509, %v550
    %v558 = vsub.f32 %v510, %v550
    %v559 = vsub.f32 %v511, %v547
    %v560 = vsub.f32 %v512, %v547
    %v561 = vsub.f32 %v513, %v548
    %v562 = vsub.f32 %v514, %v548
    %v563 = vsub.f32 %v515, %v549
    %v564 = vsub.f32 %v516, %v549
    %v565 = vsub.f32 %v517, %v550
    %v566 = vsub.f32 %v518, %v550
    %v567 = vmul.f32 %v551, %v551
    %v568 = vmul.f32 %v552, %v552
    %v569 = vmul.f32 %v553, %v553
    %v570 = vmul.f32 %v554, %v554
    %v571 = vmul.f32 %v555, %v555
    %v572 = vmul.f32 %v556, %v556
    %v573 = vmul.f32 %v557, %v557
    %v574 = vmul.f32 %v558, %v558
    %v575 = vmul.f32 %v559, %v559
    %v576 = vmul.f32 %v560, %v560
    %v577 = vmul.f32 %v561, %v561
    %v578 = vmul.f32 %v562, %v562
    %v579 = vmul.f32 %v563, %v563
    %v580 = vmul.f32 %v564, %v564
    %v581 = vmul.f32 %v565, %v565
    %v582 = vmul.f32 %v566, %v566
    %v583 = vadd.f32 %v567, %v568
    %584 = vadd.xlane.f32.xlu0 %v583
    %v585 = vpop.xlane.xlu0 %584
    %v586 = vadd.f32 %v569, %v570
    %587 = vadd.xlane.f32.xlu0 %v586
    %v588 = vpop.xlane.xlu0 %587
    %v589 = vadd.f32 %v571, %v572
    %590 = vadd.xlane.f32.xlu0 %v589
    %v591 = vpop.xlane.xlu0 %590
    %v592 = vadd.f32 %v573, %v574
    %593 = vadd.xlane.f32.xlu0 %v592
    %v594 = vpop.xlane.xlu0 %593
    %v595 = vadd.f32 %v575, %v576
    %596 = vadd.xlane.f32.xlu0 %v595
    %v597 = vpop.xlane.xlu0 %596
    %v598 = vadd.f32 %v577, %v578
    %599 = vadd.xlane.f32.xlu0 %v598
    %v600 = vpop.xlane.xlu0 %599
    %v601 = vadd.f32 %v579, %v580
    %602 = vadd.xlane.f32.xlu0 %v601
    %v603 = vpop.xlane.xlu0 %602
    %v604 = vadd.f32 %v581, %v582
    %605 = vadd.xlane.f32.xlu0 %v604
    %v606 = vpop.xlane.xlu0 %605
    %v607 = vadd.f32 %v585, %v597
    %v608 = vadd.f32 %v588, %v600
    %v609 = vadd.f32 %v591, %v603
    %v610 = vadd.f32 %v594, %v606
    %v611 = vmul.f32 %v607, 0.001953125
    %v612 = vmul.f32 %v608, 0.001953125
    %v613 = vmul.f32 %v609, 0.001953125
    %v614 = vmul.f32 %v610, 0.001953125
    %v615 = vld [vmem:[%s5] sm:$0xff]
    %v616 = vld [vmem:[%s5 + $0x8] sm:$0xff]
    %v617 = vld [vmem:[%s5 + $0x10] sm:$0xff]
    %v618 = vld [vmem:[%s5 + $0x18] sm:$0xff]
    %v619 = vadd.f32 %v611, 1e-05
    %v620 = vadd.f32 %v612, 1e-05
    %v621 = vadd.f32 %v613, 1e-05
    %v622 = vadd.f32 %v614, 1e-05
    %v623 = vrsqrt.pop %v619
    %v624 = vrsqrt.pop %v620
    %v625 = vrsqrt.pop %v621
    %v626 = vrsqrt.pop %v622
    %v627 = vmul.f32 %v615, %v623
    %v628 = vmul.f32 %v616, %v624
    %v629 = vmul.f32 %v617, %v625
    %v630 = vmul.f32 %v618, %v626
    %v631 = vld [vmem:[%s6] sm:$0xff]
    %v632 = vld [vmem:[%s6 + $0x8] sm:$0xff]
    %v633 = vld [vmem:[%s6 + $0x10] sm:$0xff]
    %v634 = vld [vmem:[%s6 + $0x18] sm:$0xff]
    %v635 = vmul.f32 %v547, %v627
    %v636 = vmul.f32 %v548, %v628
    %v637 = vmul.f32 %v549, %v629
    %v638 = vmul.f32 %v550, %v630
    %v639 = vsub.f32 %v631, %v635
    %v640 = vsub.f32 %v632, %v636
    %v641 = vsub.f32 %v633, %v637
    %v642 = vsub.f32 %v634, %v638
    %644 = vset.pattern.permute.xlu0 0
    %645 = vperm.xlu0 %644, %v627
    %v646 = vpop.permute.xlu0 %645
    %649 = vset.pattern.permute.xlu0 0
    %650 = vperm.xlu0 %649, %v628
    %v651 = vpop.permute.xlu0 %650
    %654 = vset.pattern.permute.xlu0 0
    %655 = vperm.xlu0 %654, %v629
    %v656 = vpop.permute.xlu0 %655
    %659 = vset.pattern.permute.xlu0 0
    %660 = vperm.xlu0 %659, %v630
    %v661 = vpop.permute.xlu0 %660
    %v663 = vmul.f32 %v503, %v646
    %v664 = vmul.f32 %v504, %v646
    %v665 = vmul.f32 %v505, %v651
    %v666 = vmul.f32 %v506, %v651
    %v667 = vmul.f32 %v507, %v656
    %v668 = vmul.f32 %v508, %v656
    %v669 = vmul.f32 %v509, %v661
    %v670 = vmul.f32 %v510, %v661
    %v671 = vmul.f32 %v511, %v646
    %v672 = vmul.f32 %v512, %v646
    %v673 = vmul.f32 %v513, %v651
    %v674 = vmul.f32 %v514, %v651
    %v675 = vmul.f32 %v515, %v656
    %v676 = vmul.f32 %v516, %v656
    %v677 = vmul.f32 %v517, %v661
    %v678 = vmul.f32 %v518, %v661
    %680 = vset.pattern.permute.xlu0 0
    %681 = vperm.xlu0 %680, %v639
    %v682 = vpop.permute.xlu0 %681
    %685 = vset.pattern.permute.xlu0 0
    %686 = vperm.xlu0 %685, %v640
    %v687 = vpop.permute.xlu0 %686
    %690 = vset.pattern.permute.xlu0 0
    %691 = vperm.xlu0 %690, %v641
    %v692 = vpop.permute.xlu0 %691
    %695 = vset.pattern.permute.xlu0 0
    %696 = vperm.xlu0 %695, %v642
    %v697 = vpop.permute.xlu0 %696
    %v699 = vadd.f32 %v663, %v682
    %v700 = vadd.f32 %v664, %v682
    %v701 = vadd.f32 %v665, %v687
    %v702 = vadd.f32 %v666, %v687
    %v703 = vadd.f32 %v667, %v692
    %v704 = vadd.f32 %v668, %v692
    %v705 = vadd.f32 %v669, %v697
    %v706 = vadd.f32 %v670, %v697
    %v707 = vadd.f32 %v671, %v682
    %v708 = vadd.f32 %v672, %v682
    %v709 = vadd.f32 %v673, %v687
    %v710 = vadd.f32 %v674, %v687
    %v711 = vadd.f32 %v675, %v692
    %v712 = vadd.f32 %v676, %v692
    %v713 = vadd.f32 %v677, %v697
    %v714 = vadd.f32 %v678, %v697
    %v715 = vld [vmem:[%s0] sm:$0xff]
    %v716 = vld [vmem:[%s0 + $0x8] sm:$0xff]
    %v717 = vld [vmem:[%s0 + $0x10] sm:$0xff]
    %v718 = vld [vmem:[%s0 + $0x18] sm:$0xff]
    %v719 = vld [vmem:[%s0 + $0x20] sm:$0xff]
    %v720 = vld [vmem:[%s0 + $0x28] sm:$0xff]
    %v721 = vld [vmem:[%s0 + $0x30] sm:$0xff]
    %v722 = vld [vmem:[%s0 + $0x38] sm:$0xff]
    %v723 = vld [vmem:[%s0 + $0x40] sm:$0xff]
    %v724 = vld [vmem:[%s0 + $0x48] sm:$0xff]
    %v725 = vld [vmem:[%s0 + $0x50] sm:$0xff]
    %v726 = vld [vmem:[%s0 + $0x58] sm:$0xff]
    %v727 = vld [vmem:[%s0 + $0x60] sm:$0xff]
    %v728 = vld [vmem:[%s0 + $0x68] sm:$0xff]
    %v729 = vld [vmem:[%s0 + $0x70] sm:$0xff]
    %v730 = vld [vmem:[%s0 + $0x78] sm:$0xff]
    %v731 = vadd.f32 %v699, %v715
    %v732 = vadd.f32 %v700, %v716
    %v733 = vadd.f32 %v701, %v717
    %v734 = vadd.f32 %v702, %v718
    %v735 = vadd.f32 %v703, %v719
    %v736 = vadd.f32 %v704, %v720
    %v737 = vadd.f32 %v705, %v721
    %v738 = vadd.f32 %v706, %v722
    %v739 = vadd.f32 %v707, %v723
    %v740 = vadd.f32 %v708, %v724
    %v741 = vadd.f32 %v709, %v725
    %v742 = vadd.f32 %v710, %v726
    %v743 = vadd.f32 %v711, %v727
    %v744 = vadd.f32 %v712, %v728
    %v745 = vadd.f32 %v713, %v729
    %v746 = vadd.f32 %v714, %v730
    %747 = vst [vmem:[#allocation9] sm:$0xff] %v731
    %748 = vst [vmem:[#allocation9 + $0x8] sm:$0xff] %v732
    %749 = vst [vmem:[#allocation9 + $0x10] sm:$0xff] %v733
    %750 = vst [vmem:[#allocation9 + $0x18] sm:$0xff] %v734
    %751 = vst [vmem:[#allocation9 + $0x20] sm:$0xff] %v735
    %752 = vst [vmem:[#allocation9 + $0x28] sm:$0xff] %v736
    %753 = vst [vmem:[#allocation9 + $0x30] sm:$0xff] %v737
    %754 = vst [vmem:[#allocation9 + $0x38] sm:$0xff] %v738
    %755 = vst [vmem:[#allocation9 + $0x40] sm:$0xff] %v739
    %756 = vst [vmem:[#allocation9 + $0x48] sm:$0xff] %v740
    %757 = vst [vmem:[#allocation9 + $0x50] sm:$0xff] %v741
    %758 = vst [vmem:[#allocation9 + $0x58] sm:$0xff] %v742
    %759 = vst [vmem:[#allocation9 + $0x60] sm:$0xff] %v743
    %760 = vst [vmem:[#allocation9 + $0x68] sm:$0xff] %v744
    %761 = vst [vmem:[#allocation9 + $0x70] sm:$0xff] %v745
    %762 = vst [vmem:[#allocation9 + $0x78] sm:$0xff] %v746
    // Predicated region
    $region52: #{tpu_custom_call.1} parent=1 // pred_check
      _
    $region53: #{tpu_custom_call.1} parent=1 // pred_check_branch
      %764 = sbr.rel (0) target = $region55
    $region54: #{tpu_custom_call.1} parent=1 // pred_region
      %s766 = ssub.s32 2048, 2048
      %767 = vsyncadd [#allocation6], %s766
      %s768 = sshll.u32 [#allocation9], 4
      %s769 = int_to_ptr.vmem [resolvable:$true] %s768
      %774 = dma.vmem_to_hbm [thread:$0]  %s769, 2048, %s7, [#allocation6], 256, 256, 16
    $region55: #{tpu_custom_call.1} parent=1 // pred_fallthru
      _
    // Predicated region
    $region56: #{tpu_custom_call.1} parent=1 // pred_check
      _
    $region57: #{tpu_custom_call.1} parent=1 // pred_check_branch
      %776 = sbr.rel (0) target = $region59
    $region58: #{tpu_custom_call.1} parent=1 // pred_region
      %777 = dma.done [#allocation6], 2048
    $region59: #{tpu_custom_call.1} parent=1 // pred_fallthru
      _
    %778 = vsyncpa [#allocation5], 1
    %779 = vsyncpa [#allocation8], 1
    %780 = vsyncpa [#allocation6], 1

</llo_original>
